<compile_context>
chip_gen: v7x
topology: tpu7x:2x2x1
jax: 0.10.0
libtpu: 0.0.40
codegen_flags: <defaults>
</compile_context>

<pallas_src>
import functools

import jax
import jax.numpy as jnp
import numpy as np
from jax.experimental import pallas as pl
from jax.experimental.pallas import tpu as pltpu


# ----------------------------- config (synthetic) -----------------------------
BATCH = 2
DIT_SEQ = 16          # number of DiT (query) tokens
TEXT_SEQ = 8          # number of text (key/value) tokens
DIT_HIDDEN = 32       # config.dit_hidden_size
TEXT_HIDDEN = 24      # config.text_hidden_size
NUM_HEADS = 4         # config.base_config.num_attention_heads
NUM_KV_HEADS = 2      # config.base_config.num_key_value_heads
HEAD_DIM = 16         # config.base_config.head_dim
RMS_EPS = 1e-6        # config.base_config.rms_norm_eps
# attention_bias = False, qk_norm = True, model_type = 'DiT'


# --------------------------------- kernel -------------------------------------
def dit_cross_attn_kernel(dit_ref, textT_ref, wq_ref, wkvT_ref, woT_ref, scale_ref,
                          outT_ref, *, num_heads, num_kv_heads, head_dim, eps):
    """One batch element of DiT cross-attention.

    dit_ref:   (Nq, D_dit)          bf16 query-side hidden states
    textT_ref: (D_text, Nk)         bf16 text hidden states, transposed
    wq_ref:    (D_dit, H*hd)        bf16 q_proj weight (x @ Wq layout)
    wkvT_ref:  (2*Hk*hd, D_text)    bf16 fused [Wk^T ; Wv^T] (K rows, then V rows)
    woT_ref:   (D_dit, H*hd)        bf16 o_proj weight, transposed
    scale_ref: (1, hd)              f32  (1+q_norm_w)*(1+k_norm_w)/sqrt(hd)
    outT_ref:  (D_dit, Nq)          f32  output, transposed
    """
    H, Hk, hd = num_heads, num_kv_heads, head_dim
    groups = H // Hk
    nk = textT_ref.shape[1]

    x = dit_ref[...]                                   # (Nq, D_dit)   bf16
    tT = textT_ref[...]                                # (D_text, Nk)  bf16

    # ---- projections: two dense 2D MXU matmuls (one push each, lane-dense) ----
    q2d = jnp.dot(x, wq_ref[...], preferred_element_type=jnp.float32)     # (Nq, H*hd)
    kvT = jnp.dot(wkvT_ref[...], tT, preferred_element_type=jnp.float32)  # (2*Hk*hd, Nk)

    # ---- head split ----
    # q: one-time relayout to seq-major (H, Nq, hd) where attention needs it.
    q = jnp.stack([q2d[:, h * hd:(h + 1) * hd] for h in range(H)], axis=0)
    # k/v: d-major (Hk, hd, Nk).  Row slices are sublane-aligned (hd = 16 rows),
    # and the K|V split is along the leading/major axis -> no lane-shift copies.
    k = jnp.stack([kvT[j * hd:(j + 1) * hd, :] for j in range(Hk)], axis=0)
    v = jnp.stack([kvT[(Hk + j) * hd:(Hk + j + 1) * hd, :] for j in range(Hk)], axis=0)

    # ---- Gemma RMSNorm in f32.  (1+w_q)(1+w_k)/sqrt(hd) is folded into
    # `scale_ref` and applied to q only (the score is bilinear per dim). ----
    q = q * jax.lax.rsqrt(jnp.mean(q * q, axis=-1, keepdims=True) + eps)
    q = q * scale_ref[...]                     # (1, hd) broadcasts over (H, Nq, hd)
    k = k * jax.lax.rsqrt(jnp.mean(k * k, axis=1, keepdims=True) + eps)

    # ---- repeat_kv: kv head j serves query heads [j*groups, (j+1)*groups). ----
    k = jnp.broadcast_to(k[:, None], (Hk, groups, hd, nk)).reshape(H, hd, nk)
    v = jnp.broadcast_to(v[:, None], (Hk, groups, hd, nk)).reshape(H, hd, nk)

    # ---- non-causal softmax attention; softmax scale already folded into q.
    # K is d-major so the contraction dim is already sublane-major (no K vxpose).
    # TODO(synk): optional additive attention_mask path not wired (mask is None here).
    s = jnp.einsum('hqd,hdk->hqk', q.astype(jnp.bfloat16), k.astype(jnp.bfloat16),
                   preferred_element_type=jnp.float32)            # (H, Nq, Nk)
    # Scores are bounded (RMS-normalized q/k, bounded folded scale) -> exp() is
    # safe in f32 without the max-subtraction (an XLU lane-reduce saved).
    p = jnp.exp(s)
    p = p * pl.reciprocal(jnp.sum(p, axis=-1, keepdims=True), approx=True)
    # P·V as a batched A·Bᵀ with V d-major -> ctx comes out d-major directly.
    ctxT = jnp.einsum('hdk,hqk->hdq', v.astype(jnp.bfloat16), p.astype(jnp.bfloat16),
                      preferred_element_type=jnp.float32)         # (H, hd, Nq)

    # ---- o_proj: one dense matmul.  Concatenating the per-head (hd, Nq) tiles
    # along sublanes gives (H*hd, Nq); the reduction over heads then happens
    # inside the MXU accumulator (no (H, Nq, Dd) f32 intermediate, no VALU sum).
    ctx2dT = jnp.concatenate([ctxT[h] for h in range(H)], axis=0)  # (H*hd, Nq)
    outT_ref[...] = jnp.dot(woT_ref[...], ctx2dT.astype(jnp.bfloat16),
                            preferred_element_type=jnp.float32).astype(outT_ref.dtype)


# --------------------------------- wrapper ------------------------------------
def dit_cross_attention(dit_hidden, text_hidden, wq, wk, wv, wo, qnorm_w, knorm_w):
    B, Nq, Dd = dit_hidden.shape
    _, Nk, Dt = text_hidden.shape
    H, Hk, hd = NUM_HEADS, NUM_KV_HEADS, HEAD_DIM

    # ---- one-time parameter layout / fusion (cached with the params in practice) ----
    wq_b = wq.astype(jnp.bfloat16)                                        # (Dd, H*hd)
    wkvT = jnp.concatenate([wk.T, wv.T], axis=0).astype(jnp.bfloat16)     # (2*Hk*hd, Dt)
    woT = wo.T.astype(jnp.bfloat16)                                       # (Dd, H*hd)
    qk_scale = ((1.0 + qnorm_w.reshape(1, hd).astype(jnp.float32))
                * (1.0 + knorm_w.reshape(1, hd).astype(jnp.float32))
                * jnp.float32(1.0 / np.sqrt(hd)))                         # (1, hd) f32

    # bf16 activations halve HBM->VMEM DMA; sensitive math stays f32 in-kernel.
    dit_b = dit_hidden.astype(jnp.bfloat16)                               # (B, Nq, Dd)
    textT_b = jnp.swapaxes(text_hidden, 1, 2).astype(jnp.bfloat16)        # (B, Dt, Nk)

    kernel = functools.partial(
        dit_cross_attn_kernel,
        num_heads=H, num_kv_heads=Hk, head_dim=hd, eps=RMS_EPS)

    outT = pl.pallas_call(
        kernel,
        out_shape=jax.ShapeDtypeStruct((B, Dd, Nq), dit_hidden.dtype),
        grid_spec=pltpu.PrefetchScalarGridSpec(
            num_scalar_prefetch=0,
            grid=(B,),
            in_specs=[
                pl.BlockSpec((None, Nq, Dd), lambda b: (b, 0, 0)),        # dit (bf16)
                pl.BlockSpec((None, Dt, Nk), lambda b: (b, 0, 0)),        # text^T (bf16)
                pl.BlockSpec((Dd, H * hd), lambda b: (0, 0)),             # Wq
                pl.BlockSpec((2 * Hk * hd, Dt), lambda b: (0, 0)),        # [Wk^T ; Wv^T]
                pl.BlockSpec((Dd, H * hd), lambda b: (0, 0)),             # Wo^T
                pl.BlockSpec((1, hd), lambda b: (0, 0)),                  # folded scale
            ],
            out_specs=pl.BlockSpec((None, Dd, Nq), lambda b: (b, 0, 0)),
        ),
        compiler_params=pltpu.CompilerParams(
            dimension_semantics=("parallel",)),   # B >= 2 keeps both v7x TCs busy
    )(dit_b, textT_b, wq_b, wkvT, woT, qk_scale)

    # layout plumbing back to (B, Nq, Dd)
    return jnp.swapaxes(outT, 1, 2)


# ------------------------------- pure-JAX reference ----------------------------
def reference(dit_hidden, text_hidden, wq, wk, wv, wo, qnorm_w, knorm_w):
    B, Nq, _ = dit_hidden.shape
    _, Nk, _ = text_hidden.shape
    H, Hk, hd = NUM_HEADS, NUM_KV_HEADS, HEAD_DIM
    groups = H // Hk

    q = dit_hidden @ wq
    k = text_hidden @ wk
    v = text_hidden @ wv
    q = q.reshape(B, Nq, H, hd).transpose(0, 2, 1, 3)      # b h n d
    k = k.reshape(B, Nk, Hk, hd).transpose(0, 2, 1, 3)
    v = v.reshape(B, Nk, Hk, hd).transpose(0, 2, 1, 3)

    def rms(x, w):
        x32 = x.astype(jnp.float32)
        n = x32 * jax.lax.rsqrt(jnp.mean(x32 * x32, axis=-1, keepdims=True) + RMS_EPS)
        return n * (1.0 + w.reshape(-1).astype(jnp.float32))

    q = rms(q, qnorm_w)
    k = rms(k, knorm_w)

    k = jnp.repeat(k, groups, axis=1)   # repeat_kv
    v = jnp.repeat(v, groups, axis=1)

    s = jnp.einsum("bhqd,bhkd->bhqk", q, k) / (hd ** 0.5)
    p = jax.nn.softmax(s, axis=-1)
    ctx = jnp.einsum("bhqk,bhkd->bhqd", p, v)
    ctx = ctx.transpose(0, 2, 1, 3).reshape(B, Nq, H * hd)
    return ctx @ wo


# ----------------------------------- main --------------------------------------
if __name__ == "__main__":
    key = jax.random.PRNGKey(0)
    ks = jax.random.split(key, 8)

    dit_hidden = jax.random.normal(ks[0], (BATCH, DIT_SEQ, DIT_HIDDEN), jnp.float32)
    text_hidden = jax.random.normal(ks[1], (BATCH, TEXT_SEQ, TEXT_HIDDEN), jnp.float32)

    # nn.Linear weights are stored [out, in] in torch; here they are kept [in, out]
    # so every projection is x @ W.
    wq = 0.05 * jax.random.normal(ks[2], (DIT_HIDDEN, NUM_HEADS * HEAD_DIM), jnp.float32)
    wk = 0.05 * jax.random.normal(ks[3], (TEXT_HIDDEN, NUM_KV_HEADS * HEAD_DIM), jnp.float32)
    wv = 0.05 * jax.random.normal(ks[4], (TEXT_HIDDEN, NUM_KV_HEADS * HEAD_DIM), jnp.float32)
    wo = 0.05 * jax.random.normal(ks[5], (NUM_HEADS * HEAD_DIM, DIT_HIDDEN), jnp.float32)
    # GemmaRMSNorm weights (torch init is zeros; use small values to exercise the path)
    qnorm_w = 0.1 * jax.random.normal(ks[6], (1, HEAD_DIM), jnp.float32)
    knorm_w = 0.1 * jax.random.normal(ks[7], (1, HEAD_DIM), jnp.float32)

    out = dit_cross_attention(dit_hidden, text_hidden, wq, wk, wv, wo, qnorm_w, knorm_w)
    out = jax.block_until_ready(out)

    ref = reference(dit_hidden, text_hidden, wq, wk, wv, wo, qnorm_w, knorm_w)
    # bf16 MXU inputs + approx reciprocal -> compare with mixed-precision tolerance.
    np.testing.assert_allclose(np.asarray(out), np.asarray(ref), atol=3e-2, rtol=3e-2)

    print("KERNEL_OK")
</pallas_src>

<mosaic_0001>
module attributes {stable_mosaic.version = 11 : i64} {
  func.func @dit_cross_attn_kernel(%arg0: i32, %arg1: memref<1x16x32xbf16, #tpu.memory_space<vmem>>, %arg2: memref<1x24x8xbf16, #tpu.memory_space<vmem>>, %arg3: memref<32x64xbf16, #tpu.memory_space<vmem>>, %arg4: memref<64x24xbf16, #tpu.memory_space<vmem>>, %arg5: memref<32x64xbf16, #tpu.memory_space<vmem>>, %arg6: memref<1x16xf32, #tpu.memory_space<vmem>>, %arg7: memref<1x32x16xf32, #tpu.memory_space<vmem>>) attributes {dimension_semantics = [#tpu.dimension_semantics<parallel>], iteration_bounds = array<i64: 2>, scalar_prefetch = 0 : i64, scratch_operands = 0 : i64, tpu.core_type = #tpu.core_type<tc>, window_params = [{transform_indices = @transform_0, window_bounds = array<i64: 1, 16, 32>}, {transform_indices = @transform_1, window_bounds = array<i64: 1, 24, 8>}, {pipeline_mode = #tpu.pipeline_mode<synchronous>, transform_indices = @transform_2, window_bounds = array<i64: 32, 64>}, {pipeline_mode = #tpu.pipeline_mode<synchronous>, transform_indices = @transform_3, window_bounds = array<i64: 64, 24>}, {pipeline_mode = #tpu.pipeline_mode<synchronous>, transform_indices = @transform_4, window_bounds = array<i64: 32, 64>}, {pipeline_mode = #tpu.pipeline_mode<synchronous>, transform_indices = @transform_5, window_bounds = array<i64: 1, 16>}, {transform_indices = @transform_6, window_bounds = array<i64: 1, 32, 16>}]} {
    %c0 = arith.constant 0 : index
    %c0_0 = arith.constant 0 : index
    %c0_1 = arith.constant 0 : index
    %0 = vector.load %arg1[%c0, %c0_0, %c0_1] : memref<1x16x32xbf16, #tpu.memory_space<vmem>>, vector<1x16x32xbf16>
    %1 = vector.shape_cast %0 : vector<1x16x32xbf16> to vector<16x32xbf16>
    %c0_2 = arith.constant 0 : index
    %c0_3 = arith.constant 0 : index
    %c0_4 = arith.constant 0 : index
    %2 = vector.load %arg2[%c0_2, %c0_3, %c0_4] : memref<1x24x8xbf16, #tpu.memory_space<vmem>>, vector<1x24x8xbf16>
    %3 = vector.shape_cast %2 : vector<1x24x8xbf16> to vector<24x8xbf16>
    %c0_5 = arith.constant 0 : index
    %c0_6 = arith.constant 0 : index
    %4 = vector.load %arg3[%c0_5, %c0_6] : memref<32x64xbf16, #tpu.memory_space<vmem>>, vector<32x64xbf16>
    %cst = arith.constant dense<0.000000e+00> : vector<16x64xf32>
    %5 = tpu.matmul %1, %4, %cst {dimension_numbers = #tpu.dot_dimension_numbers<[1], [0], [0], [1], [0, 0, 1, 1], [], []>} : vector<16x32xbf16>, vector<32x64xbf16>, vector<16x64xf32> -> vector<16x64xf32>
    %c0_7 = arith.constant 0 : index
    %c0_8 = arith.constant 0 : index
    %6 = vector.load %arg4[%c0_7, %c0_8] : memref<64x24xbf16, #tpu.memory_space<vmem>>, vector<64x24xbf16>
    %cst_9 = arith.constant dense<0.000000e+00> : vector<64x8xf32>
    %7 = tpu.matmul %6, %3, %cst_9 {dimension_numbers = #tpu.dot_dimension_numbers<[1], [0], [0], [1], [0, 0, 1, 1], [], []>} : vector<64x24xbf16>, vector<24x8xbf16>, vector<64x8xf32> -> vector<64x8xf32>
    %8 = vector.extract_strided_slice %5 {offsets = [0, 0], sizes = [16, 16], strides = [1, 1]} : vector<16x64xf32> to vector<16x16xf32>
    %9 = vector.extract_strided_slice %5 {offsets = [0, 16], sizes = [16, 16], strides = [1, 1]} : vector<16x64xf32> to vector<16x16xf32>
    %10 = vector.extract_strided_slice %5 {offsets = [0, 32], sizes = [16, 16], strides = [1, 1]} : vector<16x64xf32> to vector<16x16xf32>
    %11 = vector.extract_strided_slice %5 {offsets = [0, 48], sizes = [16, 16], strides = [1, 1]} : vector<16x64xf32> to vector<16x16xf32>
    %12 = vector.shape_cast %8 : vector<16x16xf32> to vector<1x16x16xf32>
    %13 = vector.shape_cast %9 : vector<16x16xf32> to vector<1x16x16xf32>
    %14 = vector.shape_cast %10 : vector<16x16xf32> to vector<1x16x16xf32>
    %15 = vector.shape_cast %11 : vector<16x16xf32> to vector<1x16x16xf32>
    %16 = tpu.concatenate %12, %13, %14, %15 in 0 : vector<1x16x16xf32>, vector<1x16x16xf32>, vector<1x16x16xf32>, vector<1x16x16xf32> -> vector<4x16x16xf32>
    %17 = vector.extract_strided_slice %7 {offsets = [0, 0], sizes = [16, 8], strides = [1, 1]} : vector<64x8xf32> to vector<16x8xf32>
    %18 = vector.extract_strided_slice %7 {offsets = [16, 0], sizes = [16, 8], strides = [1, 1]} : vector<64x8xf32> to vector<16x8xf32>
    %19 = vector.shape_cast %17 : vector<16x8xf32> to vector<1x16x8xf32>
    %20 = vector.shape_cast %18 : vector<16x8xf32> to vector<1x16x8xf32>
    %21 = tpu.concatenate %19, %20 in 0 : vector<1x16x8xf32>, vector<1x16x8xf32> -> vector<2x16x8xf32>
    %22 = vector.extract_strided_slice %7 {offsets = [32, 0], sizes = [16, 8], strides = [1, 1]} : vector<64x8xf32> to vector<16x8xf32>
    %23 = vector.extract_strided_slice %7 {offsets = [48, 0], sizes = [16, 8], strides = [1, 1]} : vector<64x8xf32> to vector<16x8xf32>
    %24 = vector.shape_cast %22 : vector<16x8xf32> to vector<1x16x8xf32>
    %25 = vector.shape_cast %23 : vector<16x8xf32> to vector<1x16x8xf32>
    %26 = tpu.concatenate %24, %25 in 0 : vector<1x16x8xf32>, vector<1x16x8xf32> -> vector<2x16x8xf32>
    %27 = arith.mulf %16, %16 : vector<4x16x16xf32>
    %cst_10 = arith.constant dense<0.000000e+00> : vector<4x16xf32>
    %28 = vector.multi_reduction <add>, %27, %cst_10 [2] : vector<4x16x16xf32> to vector<4x16xf32>
    %29 = vector.shape_cast %28 : vector<4x16xf32> to vector<4x16x1xf32>
    %cst_11 = arith.constant 1.600000e+01 : f32
    %30 = vector.broadcast %cst_11 : f32 to vector<4x16x1xf32>
    %31 = arith.divf %29, %30 : vector<4x16x1xf32>
    %cst_12 = arith.constant 9.99999997E-7 : f32
    %32 = vector.broadcast %cst_12 : f32 to vector<4x16x1xf32>
    %33 = arith.addf %31, %32 : vector<4x16x1xf32>
    %34 = math.rsqrt %33 : vector<4x16x1xf32>
    %35 = vector.broadcast %34 : vector<4x16x1xf32> to vector<4x16x16xf32>
    %36 = arith.mulf %16, %35 : vector<4x16x16xf32>
    %c0_13 = arith.constant 0 : index
    %c0_14 = arith.constant 0 : index
    %37 = vector.load %arg6[%c0_13, %c0_14] : memref<1x16xf32, #tpu.memory_space<vmem>>, vector<1x16xf32>
    %38 = vector.shape_cast %37 : vector<1x16xf32> to vector<1x1x16xf32>
    %39 = vector.broadcast %38 : vector<1x1x16xf32> to vector<4x16x16xf32>
    %40 = arith.mulf %36, %39 : vector<4x16x16xf32>
    %41 = arith.mulf %21, %21 : vector<2x16x8xf32>
    %cst_15 = arith.constant dense<0.000000e+00> : vector<2x8xf32>
    %42 = vector.multi_reduction <add>, %41, %cst_15 [1] : vector<2x16x8xf32> to vector<2x8xf32>
    %43 = vector.shape_cast %42 : vector<2x8xf32> to vector<2x1x8xf32>
    %cst_16 = arith.constant 1.600000e+01 : f32
    %44 = vector.broadcast %cst_16 : f32 to vector<2x1x8xf32>
    %45 = arith.divf %43, %44 : vector<2x1x8xf32>
    %cst_17 = arith.constant 9.99999997E-7 : f32
    %46 = vector.broadcast %cst_17 : f32 to vector<2x1x8xf32>
    %47 = arith.addf %45, %46 : vector<2x1x8xf32>
    %48 = math.rsqrt %47 : vector<2x1x8xf32>
    %49 = vector.broadcast %48 : vector<2x1x8xf32> to vector<2x16x8xf32>
    %50 = arith.mulf %21, %49 : vector<2x16x8xf32>
    %51 = vector.shape_cast %50 : vector<2x16x8xf32> to vector<2x1x16x8xf32>
    %52 = vector.shape_cast %51 : vector<2x1x16x8xf32> to vector<2x1x16x8xf32>
    %53 = vector.broadcast %52 : vector<2x1x16x8xf32> to vector<2x2x16x8xf32>
    %54 = vector.shape_cast %53 : vector<2x2x16x8xf32> to vector<4x16x8xf32>
    %55 = vector.shape_cast %26 : vector<2x16x8xf32> to vector<2x1x16x8xf32>
    %56 = vector.shape_cast %55 : vector<2x1x16x8xf32> to vector<2x1x16x8xf32>
    %57 = vector.broadcast %56 : vector<2x1x16x8xf32> to vector<2x2x16x8xf32>
    %58 = vector.shape_cast %57 : vector<2x2x16x8xf32> to vector<4x16x8xf32>
    %59 = arith.truncf %40 : vector<4x16x16xf32> to vector<4x16x16xbf16>
    %60 = arith.truncf %54 : vector<4x16x8xf32> to vector<4x16x8xbf16>
    "tpu.trace_start"() <{level = 10 : i32, message = "hqd,hdk->hqk"}> : () -> ()
    %cst_18 = arith.constant dense<0.000000e+00> : vector<4x16x8xf32>
    %61 = tpu.matmul %59, %60, %cst_18 {dimension_numbers = #tpu.dot_dimension_numbers<[2], [1], [1], [2], [0, 0, 0, 1, 1, 2], [0], [0]>} : vector<4x16x16xbf16>, vector<4x16x8xbf16>, vector<4x16x8xf32> -> vector<4x16x8xf32>
    "tpu.trace_stop"() : () -> ()
    %62 = math.exp %61 : vector<4x16x8xf32>
    %cst_19 = arith.constant dense<0.000000e+00> : vector<4x16xf32>
    %63 = vector.multi_reduction <add>, %62, %cst_19 [2] : vector<4x16x8xf32> to vector<4x16xf32>
    %64 = vector.shape_cast %63 : vector<4x16xf32> to vector<4x16x1xf32>
    %65 = tpu.reciprocal %64 {approx = true} : vector<4x16x1xf32> -> vector<4x16x1xf32>
    %66 = vector.broadcast %65 : vector<4x16x1xf32> to vector<4x16x8xf32>
    %67 = arith.mulf %62, %66 : vector<4x16x8xf32>
    %68 = arith.truncf %58 : vector<4x16x8xf32> to vector<4x16x8xbf16>
    %69 = arith.truncf %67 : vector<4x16x8xf32> to vector<4x16x8xbf16>
    "tpu.trace_start"() <{level = 10 : i32, message = "hdk,hqk->hdq"}> : () -> ()
    %cst_20 = arith.constant dense<0.000000e+00> : vector<4x16x16xf32>
    %70 = tpu.matmul %68, %69, %cst_20 {dimension_numbers = #tpu.dot_dimension_numbers<[2], [2], [1], [1], [0, 0, 0, 1, 1, 1], [0], [0]>} : vector<4x16x8xbf16>, vector<4x16x8xbf16>, vector<4x16x16xf32> -> vector<4x16x16xf32>
    "tpu.trace_stop"() : () -> ()
    %71 = vector.extract_strided_slice %70 {offsets = [0, 0, 0], sizes = [1, 16, 16], strides = [1, 1, 1]} : vector<4x16x16xf32> to vector<1x16x16xf32>
    %72 = vector.shape_cast %71 : vector<1x16x16xf32> to vector<16x16xf32>
    %73 = vector.extract_strided_slice %70 {offsets = [1, 0, 0], sizes = [1, 16, 16], strides = [1, 1, 1]} : vector<4x16x16xf32> to vector<1x16x16xf32>
    %74 = vector.shape_cast %73 : vector<1x16x16xf32> to vector<16x16xf32>
    %75 = vector.extract_strided_slice %70 {offsets = [2, 0, 0], sizes = [1, 16, 16], strides = [1, 1, 1]} : vector<4x16x16xf32> to vector<1x16x16xf32>
    %76 = vector.shape_cast %75 : vector<1x16x16xf32> to vector<16x16xf32>
    %77 = vector.extract_strided_slice %70 {offsets = [3, 0, 0], sizes = [1, 16, 16], strides = [1, 1, 1]} : vector<4x16x16xf32> to vector<1x16x16xf32>
    %78 = vector.shape_cast %77 : vector<1x16x16xf32> to vector<16x16xf32>
    %79 = tpu.concatenate %72, %74, %76, %78 in 0 : vector<16x16xf32>, vector<16x16xf32>, vector<16x16xf32>, vector<16x16xf32> -> vector<64x16xf32>
    %c0_21 = arith.constant 0 : index
    %c0_22 = arith.constant 0 : index
    %80 = vector.load %arg5[%c0_21, %c0_22] : memref<32x64xbf16, #tpu.memory_space<vmem>>, vector<32x64xbf16>
    %81 = arith.truncf %79 : vector<64x16xf32> to vector<64x16xbf16>
    %cst_23 = arith.constant dense<0.000000e+00> : vector<32x16xf32>
    %82 = tpu.matmul %80, %81, %cst_23 {dimension_numbers = #tpu.dot_dimension_numbers<[1], [0], [0], [1], [0, 0, 1, 1], [], []>} : vector<32x64xbf16>, vector<64x16xbf16>, vector<32x16xf32> -> vector<32x16xf32>
    %c0_24 = arith.constant 0 : index
    %c0_25 = arith.constant 0 : index
    %c0_26 = arith.constant 0 : index
    %83 = vector.load %arg7[%c0_24, %c0_25, %c0_26] : memref<1x32x16xf32, #tpu.memory_space<vmem>>, vector<1x32x16xf32>
    %84 = vector.shape_cast %83 : vector<1x32x16xf32> to vector<32x16xf32>
    %85 = vector.shape_cast %82 : vector<32x16xf32> to vector<1x32x16xf32>
    tpu.vector_store %arg7[%c0_24, %c0_25, %c0_26], %85 {strides = array<i32>} : memref<1x32x16xf32, #tpu.memory_space<vmem>>, vector<1x32x16xf32>,
    return
  }
  func.func @transform_0(%arg0: i32) -> (i32, i32, i32) {
    %c0_i32 = arith.constant 0 : i32
    %c0_i32_0 = arith.constant 0 : i32
    %c0_i32_1 = arith.constant 0 : i32
    return %arg0, %c0_i32, %c0_i32_0 : i32, i32, i32
  }
  func.func @transform_1(%arg0: i32) -> (i32, i32, i32) {
    %c0_i32 = arith.constant 0 : i32
    %c0_i32_0 = arith.constant 0 : i32
    %c0_i32_1 = arith.constant 0 : i32
    return %arg0, %c0_i32, %c0_i32_0 : i32, i32, i32
  }
  func.func @transform_2(%arg0: i32) -> (i32, i32) {
    %c0_i32 = arith.constant 0 : i32
    %c0_i32_0 = arith.constant 0 : i32
    %c0_i32_1 = arith.constant 0 : i32
    return %c0_i32, %c0_i32_0 : i32, i32
  }
  func.func @transform_3(%arg0: i32) -> (i32, i32) {
    %c0_i32 = arith.constant 0 : i32
    %c0_i32_0 = arith.constant 0 : i32
    %c0_i32_1 = arith.constant 0 : i32
    return %c0_i32, %c0_i32_0 : i32, i32
  }
  func.func @transform_4(%arg0: i32) -> (i32, i32) {
    %c0_i32 = arith.constant 0 : i32
    %c0_i32_0 = arith.constant 0 : i32
    %c0_i32_1 = arith.constant 0 : i32
    return %c0_i32, %c0_i32_0 : i32, i32
  }
  func.func @transform_5(%arg0: i32) -> (i32, i32) {
    %c0_i32 = arith.constant 0 : i32
    %c0_i32_0 = arith.constant 0 : i32
    %c0_i32_1 = arith.constant 0 : i32
    return %c0_i32, %c0_i32_0 : i32, i32
  }
  func.func @transform_6(%arg0: i32) -> (i32, i32, i32) {
    %c0_i32 = arith.constant 0 : i32
    %c0_i32_0 = arith.constant 0 : i32
    %c0_i32_1 = arith.constant 0 : i32
    return %arg0, %c0_i32, %c0_i32_0 : i32, i32, i32
  }
}

</mosaic_0001>

<llo_original>
// kernel: tpu_custom_call.1
$region0: #{tpu_custom_call.1}
  #allocation0 [shape = 'u32[]', space=smem, size = 0x4, offset = 0x4, fixed_abs, tag = 'smem constant byte address 0x4 - core index']
  #allocation1 [shape = 'u32[144,128]{1,0:T(1,128)}', space=vmem, size = 0x12000, scoped, tag = 'internal scratch']
  %s0 = inlined_call_operand.vmem [shape: bf16[2,16,32], index: 0, kind: input, shape index: {}]
  %s1 = inlined_call_operand.vmem [shape: bf16[2,24,8], index: 1, kind: input, shape index: {}]
  %s2 = inlined_call_operand.vmem [shape: bf16[32,64], index: 2, kind: input, shape index: {}]
  %s3 = inlined_call_operand.vmem [shape: bf16[64,24], index: 3, kind: input, shape index: {}]
  %s4 = inlined_call_operand.vmem [shape: bf16[32,64], index: 4, kind: input, shape index: {}]
  %s5 = inlined_call_operand.vmem [shape: f32[1,16], index: 5, kind: input, shape index: {}]
  %s6 = inlined_call_operand.vmem [shape: f32[2,32,16], index: 6, kind: output, shape index: {}]
  %s7 = sld [smem:[#allocation0]]
  $region57: #{tpu_custom_call.1} parent=0
    _
  %s9 = ssub.s32 1, %s7
  %s10 = scalar_select 0, %s9, %s7
  loop: start=0, step=1, limit=4
  $region2: #{tpu_custom_call.1} parent=0 // loop_pre_header
    _
  $region3: #{tpu_custom_call.1} parent=0 // loop_header
    %s12 = sphi 0, %s16
    %p13 = scmp.ge.s32.totalorder %s12, 4
    %s22 = sphi 0, %s24
    %s25 = sphi 0, %s22
    %s26 = sphi 0, %s25
    %s42 = sphi 0, %s26
    %s48 = sphi 0, %s50
    %s51 = sphi 0, %s48
    %s52 = sphi 0, %s51
    %s68 = sphi 0, %s52
    %s72 = sphi 0, %s72
    %s74 = sphi 0, %s72
    %s75 = sphi 0, %s74
    %s89 = sphi 0, %s75
    %s93 = sphi 0, %s93
    %s95 = sphi 0, %s93
    %s96 = sphi 0, %s95
    %s110 = sphi 0, %s96
    %s114 = sphi 0, %s114
    %s116 = sphi 0, %s114
    %s117 = sphi 0, %s116
    %s131 = sphi 0, %s117
    %s135 = sphi 0, %s135
    %s137 = sphi 0, %s135
    %s138 = sphi 0, %s137
    %s152 = sphi 0, %s138
    %s158 = sphi 0, %s160
    %s161 = sphi 0, %s158
    %s162 = sphi 0, %s161
    %s178 = sphi 0, %s162
  $region4: #{tpu_custom_call.1} parent=0 // loop_header_branch
    %15 = sbr.rel (%p13) target = $region8
  $region5: #{tpu_custom_call.1} parent=0 // loop_body
    %s17 = ssub.s32 %s12, 1
    %s18 = ssub.s32 %s12, 2
    %s19 = sadd.s32 %s12, 1
    %s20 = ssub.s32 %s12, %s19
    %p21 = scmp.eq.s32.totalorder %s20, 0
    %s23 = sadd.s32 %s22, 1
    %s24 = scalar_select %p21, %s22, %s23
    %p27 = pneg %p21
    %p28 = scmp.eq.s32.totalorder %s12, 1
    %p29 = por %p27, %p28
    %p30 = scmp.ne.s32.totalorder %s22, %s25
    %p31 = scmp.eq.s32.totalorder %s12, 0
    %p32 = por %p30, %p31
    %p33 = scmp.ne.s32.totalorder %s22, %s25
    %p34 = scmp.eq.s32.totalorder %s17, 1
    %p35 = por %p33, %p34
    %p36 = scmp.ne.s32.totalorder %s25, %s26
    %p37 = scmp.eq.s32.totalorder %s17, 0
    %p38 = por %p36, %p37
    %p39 = scmp.ne.s32.totalorder %s25, %s26
    %p40 = scmp.eq.s32.totalorder %s18, 1
    %p41 = por %p39, %p40
    %p43 = scmp.ne.s32.totalorder %s26, %s42
    %p44 = scmp.eq.s32.totalorder %s18, 0
    %p45 = por %p43, %p44
    %s46 = ssub.s32 %s12, %s19
    %p47 = scmp.eq.s32.totalorder %s46, 0
    %s49 = sadd.s32 %s48, 1
    %s50 = scalar_select %p47, %s48, %s49
    %p53 = pneg %p47
    %p54 = scmp.eq.s32.totalorder %s12, 1
    %p55 = por %p53, %p54
    %p56 = scmp.ne.s32.totalorder %s48, %s51
    %p57 = scmp.eq.s32.totalorder %s12, 0
    %p58 = por %p56, %p57
    %p59 = scmp.ne.s32.totalorder %s48, %s51
    %p60 = scmp.eq.s32.totalorder %s17, 1
    %p61 = por %p59, %p60
    %p62 = scmp.ne.s32.totalorder %s51, %s52
    %p63 = scmp.eq.s32.totalorder %s17, 0
    %p64 = por %p62, %p63
    %p65 = scmp.ne.s32.totalorder %s51, %s52
    %p66 = scmp.eq.s32.totalorder %s18, 1
    %p67 = por %p65, %p66
    %p69 = scmp.ne.s32.totalorder %s52, %s68
    %p70 = scmp.eq.s32.totalorder %s18, 0
    %p71 = por %p69, %p70
    %s73 = sadd.s32 %s72, 1
    %p76 = scmp.eq.s32.totalorder %s12, 1
    %p77 = scmp.ne.s32.totalorder %s72, %s74
    %p78 = scmp.eq.s32.totalorder %s12, 0
    %p79 = por %p77, %p78
    %p80 = scmp.ne.s32.totalorder %s72, %s74
    %p81 = scmp.eq.s32.totalorder %s17, 1
    %p82 = por %p80, %p81
    %p83 = scmp.ne.s32.totalorder %s74, %s75
    %p84 = scmp.eq.s32.totalorder %s17, 0
    %p85 = por %p83, %p84
    %p86 = scmp.ne.s32.totalorder %s74, %s75
    %p87 = scmp.eq.s32.totalorder %s18, 1
    %p88 = por %p86, %p87
    %p90 = scmp.ne.s32.totalorder %s75, %s89
    %p91 = scmp.eq.s32.totalorder %s18, 0
    %p92 = por %p90, %p91
    %s94 = sadd.s32 %s93, 1
    %p97 = scmp.eq.s32.totalorder %s12, 1
    %p98 = scmp.ne.s32.totalorder %s93, %s95
    %p99 = scmp.eq.s32.totalorder %s12, 0
    %p100 = por %p98, %p99
    %p101 = scmp.ne.s32.totalorder %s93, %s95
    %p102 = scmp.eq.s32.totalorder %s17, 1
    %p103 = por %p101, %p102
    %p104 = scmp.ne.s32.totalorder %s95, %s96
    %p105 = scmp.eq.s32.totalorder %s17, 0
    %p106 = por %p104, %p105
    %p107 = scmp.ne.s32.totalorder %s95, %s96
    %p108 = scmp.eq.s32.totalorder %s18, 1
    %p109 = por %p107, %p108
    %p111 = scmp.ne.s32.totalorder %s96, %s110
    %p112 = scmp.eq.s32.totalorder %s18, 0
    %p113 = por %p111, %p112
    %s115 = sadd.s32 %s114, 1
    %p118 = scmp.eq.s32.totalorder %s12, 1
    %p119 = scmp.ne.s32.totalorder %s114, %s116
    %p120 = scmp.eq.s32.totalorder %s12, 0
    %p121 = por %p119, %p120
    %p122 = scmp.ne.s32.totalorder %s114, %s116
    %p123 = scmp.eq.s32.totalorder %s17, 1
    %p124 = por %p122, %p123
    %p125 = scmp.ne.s32.totalorder %s116, %s117
    %p126 = scmp.eq.s32.totalorder %s17, 0
    %p127 = por %p125, %p126
    %p128 = scmp.ne.s32.totalorder %s116, %s117
    %p129 = scmp.eq.s32.totalorder %s18, 1
    %p130 = por %p128, %p129
    %p132 = scmp.ne.s32.totalorder %s117, %s131
    %p133 = scmp.eq.s32.totalorder %s18, 0
    %p134 = por %p132, %p133
    %s136 = sadd.s32 %s135, 1
    %p139 = scmp.eq.s32.totalorder %s12, 1
    %p140 = scmp.ne.s32.totalorder %s135, %s137
    %p141 = scmp.eq.s32.totalorder %s12, 0
    %p142 = por %p140, %p141
    %p143 = scmp.ne.s32.totalorder %s135, %s137
    %p144 = scmp.eq.s32.totalorder %s17, 1
    %p145 = por %p143, %p144
    %p146 = scmp.ne.s32.totalorder %s137, %s138
    %p147 = scmp.eq.s32.totalorder %s17, 0
    %p148 = por %p146, %p147
    %p149 = scmp.ne.s32.totalorder %s137, %s138
    %p150 = scmp.eq.s32.totalorder %s18, 1
    %p151 = por %p149, %p150
    %p153 = scmp.ne.s32.totalorder %s138, %s152
    %p154 = scmp.eq.s32.totalorder %s18, 0
    %p155 = por %p153, %p154
    %s156 = ssub.s32 %s12, %s19
    %p157 = scmp.eq.s32.totalorder %s156, 0
    %s159 = sadd.s32 %s158, 1
    %s160 = scalar_select %p157, %s158, %s159
    %p163 = pneg %p157
    %p164 = scmp.eq.s32.totalorder %s12, 1
    %p165 = por %p163, %p164
    %p166 = scmp.ne.s32.totalorder %s158, %s161
    %p167 = scmp.eq.s32.totalorder %s12, 0
    %p168 = por %p166, %p167
    %p169 = scmp.ne.s32.totalorder %s158, %s161
    %p170 = scmp.eq.s32.totalorder %s17, 1
    %p171 = por %p169, %p170
    %p172 = scmp.ne.s32.totalorder %s161, %s162
    %p173 = scmp.eq.s32.totalorder %s17, 0
    %p174 = por %p172, %p173
    %p175 = scmp.ne.s32.totalorder %s161, %s162
    %p176 = scmp.eq.s32.totalorder %s18, 1
    %p177 = por %p175, %p176
    %p179 = scmp.ne.s32.totalorder %s162, %s178
    %p180 = scmp.eq.s32.totalorder %s18, 0
    %p181 = por %p179, %p180
    %p182 = scmp.le.s32.totalorder 1, %s12
    %p183 = scmp.lt.s32.totalorder %s12, 3
    %p184 = pnand %p182, %p183
    %p185 = pneg %p184
    // Predicated region
    $region9: #{tpu_custom_call.1} parent=5 // pred_check
      _
    $region10: #{tpu_custom_call.1} parent=5 // pred_check_branch
      %187 = sbr.rel (%p184) target = $region12
    $region11: #{tpu_custom_call.1} parent=5 // pred_region
      %s188 = ssub.s32 %s12, 1
      // Predicated region
      $region13: #{tpu_custom_call.1} parent=11 // pred_check
        %p189 = pneg %p85
      $region14: #{tpu_custom_call.1} parent=11 // pred_check_branch
        %191 = sbr.rel (%p189) target = $region16
      $region15: #{tpu_custom_call.1} parent=11 // pred_region
        _
      $region16: #{tpu_custom_call.1} parent=11 // pred_fallthru
        _
      // Predicated region
      $region17: #{tpu_custom_call.1} parent=11 // pred_check
        %p192 = pneg %p106
      $region18: #{tpu_custom_call.1} parent=11 // pred_check_branch
        %194 = sbr.rel (%p192) target = $region20
      $region19: #{tpu_custom_call.1} parent=11 // pred_region
        _
      $region20: #{tpu_custom_call.1} parent=11 // pred_fallthru
        _
      // Predicated region
      $region21: #{tpu_custom_call.1} parent=11 // pred_check
        %p195 = pneg %p127
      $region22: #{tpu_custom_call.1} parent=11 // pred_check_branch
        %197 = sbr.rel (%p195) target = $region24
      $region23: #{tpu_custom_call.1} parent=11 // pred_region
        _
      $region24: #{tpu_custom_call.1} parent=11 // pred_fallthru
        _
      // Predicated region
      $region25: #{tpu_custom_call.1} parent=11 // pred_check
        %p198 = pneg %p148
      $region26: #{tpu_custom_call.1} parent=11 // pred_check_branch
        %200 = sbr.rel (%p198) target = $region28
      $region27: #{tpu_custom_call.1} parent=11 // pred_region
        _
      $region28: #{tpu_custom_call.1} parent=11 // pred_fallthru
        _
    $region12: #{tpu_custom_call.1} parent=5 // pred_fallthru
      _
    %p201 = scmp.lt.s32.totalorder %s12, 2
    // Predicated region
    $region29: #{tpu_custom_call.1} parent=5 // pred_check
      %p202 = pneg %p201
    $region30: #{tpu_custom_call.1} parent=5 // pred_check_branch
      %204 = sbr.rel (%p202) target = $region32
    $region31: #{tpu_custom_call.1} parent=5 // pred_region
      // Predicated region
      $region33: #{tpu_custom_call.1} parent=31 // pred_check
        %p205 = pneg %p32
      $region34: #{tpu_custom_call.1} parent=31 // pred_check_branch
        %207 = sbr.rel (%p205) target = $region36
      $region35: #{tpu_custom_call.1} parent=31 // pred_region
        %p208 = scmp.lt.s32.totalorder %s12, 1
        %s209 = scalar_select %p208, %s12, 1
        %s210 = smul.addr %s209, 2
        %s211 = smul.addr %s210, 4
        %s212 = scalar_lea.vmem %s0, %s211
      $region36: #{tpu_custom_call.1} parent=31 // pred_fallthru
        _
      // Predicated region
      $region37: #{tpu_custom_call.1} parent=31 // pred_check
        %p213 = pneg %p58
      $region38: #{tpu_custom_call.1} parent=31 // pred_check_branch
        %215 = sbr.rel (%p213) target = $region40
      $region39: #{tpu_custom_call.1} parent=31 // pred_region
        %p216 = scmp.lt.s32.totalorder %s12, 1
        %s217 = scalar_select %p216, %s12, 1
        %s218 = smul.addr %s217, 3
        %s219 = smul.addr %s218, 4
        %s220 = scalar_lea.vmem %s1, %s219
      $region40: #{tpu_custom_call.1} parent=31 // pred_fallthru
        _
    $region32: #{tpu_custom_call.1} parent=5 // pred_fallthru
      _
    %p221 = scmp.le.s32.totalorder 1, %s12
    %p222 = scmp.lt.s32.totalorder %s12, 3
    %p223 = pnand %p221, %p222
    %p224 = pneg %p223
    // Predicated region
    $region41: #{tpu_custom_call.1} parent=5 // pred_check
      _
    $region42: #{tpu_custom_call.1} parent=5 // pred_check_branch
      %226 = sbr.rel (%p223) target = $region44
    $region43: #{tpu_custom_call.1} parent=5 // pred_region
      %s227 = ssub.s32 %s12, 1
      %p228 = scmp.lt.s32.totalorder %s17, 1
      %s229 = scalar_select %p228, %s17, 1
      %s230 = smul.addr %s229, 2
      %s231 = smul.addr %s230, 4
      %s232 = scalar_lea.vmem %s0, %s231
      %p233 = pneg %p38
      %p234 = pneg %p35
      %p235 = scmp.lt.s32.totalorder %s17, 1
      %s236 = scalar_select %p235, %s17, 1
      %s237 = smul.addr %s236, 3
      %s238 = smul.addr %s237, 4
      %s239 = scalar_lea.vmem %s1, %s238
      %p240 = pneg %p64
      %p241 = pneg %p61
      %p242 = pneg %p85
      %p243 = pneg %p82
      %p244 = pneg %p106
      %p245 = pneg %p103
      %p246 = pneg %p127
      %p247 = pneg %p124
      %p248 = pneg %p148
      %p249 = pneg %p145
      %p250 = pneg %p174
      %p251 = pneg %p171
      %p252 = scmp.lt.s32.totalorder %s17, 1
      %s253 = scalar_select %p252, %s17, 1
      %s254 = smul.addr %s253, 4
      %s255 = smul.addr %s254, 8
      %s256 = scalar_lea.vmem %s6, %s255
      %p257 = scmp.lt.s32.totalorder %s17, 1
      %s258 = scalar_select %p257, %s17, 1
      %s259 = smul.addr %s258, 2
      %s260 = smul.addr %s259, 4
      %s261 = scalar_lea.vmem %s0, %s260
      %p262 = scmp.lt.s32.totalorder %s17, 1
      %s263 = scalar_select %p262, %s17, 1
      %s264 = smul.addr %s263, 3
      %s265 = smul.addr %s264, 4
      %s266 = scalar_lea.vmem %s1, %s265
      %p267 = scmp.lt.s32.totalorder %s17, 1
      %s268 = scalar_select %p267, %s17, 1
      %s269 = smul.addr %s268, 4
      %s270 = smul.addr %s269, 8
      %s271 = scalar_lea.vmem %s6, %s270
      %v273 = vld [vmem:[%s261] sm:$0xf]
      %v274 = vld [vmem:[%s261 + $0x4] sm:$0xf]
      %v275 = vld [vmem:[%s266] sm:$0xf]
      %v276 = vld [vmem:[%s266 + $0x4] sm:$0xf]
      %v277 = vld [vmem:[%s266 + $0x8] sm:$0xf]
      %v278 = vld [vmem:[%s2] sm:$0xf]
      %v279 = vld [vmem:[%s2 + $0x4] sm:$0xf]
      %v280 = vld [vmem:[%s2 + $0x8] sm:$0xf]
      %v281 = vld [vmem:[%s2 + $0xc] sm:$0xf]
      %v284 = vunpack.c.l.b16 %v273
      %v285 = vunpack.c.l.b16 %v274
      %v286 = vpack.c.b16 %v285, %v284
      %v291 = vunpack.c.l.b16 %v278
      %v292 = vunpack.c.l.b16 %v279
      %v293 = vunpack.c.l.b16 %v280
      %v294 = vunpack.c.l.b16 %v281
      %v295 = vpack.c.b16 %v292, %v291
      %v296 = vpack.c.b16 %v294, %v293
      %vm299 = vcmask 261120
      %v301 = vsel %vm299, %v286, 0
      %303 = vmatprep.subr.bf16.mxu0 0
      %304 = vmatpush1.bf16.msra.mxu0 %v295
      %305 = vmatprep.subr.bf16.mxu0 0
      %306 = vmatpush1.bf16.msra.mxu0 %v296
      %307 = vmatprep.subr.bf16.mxu0 0
      %308 = vmatpush1.bf16.msra.mxu0 0
      %309 = vmatprep.subr.bf16.mxu0 0
      %310 = vmatpush1.bf16.msra.mxu0 0
      %311 = vmatprep.subr.bf16.mxu0 0
      %312 = vmatpush1.bf16.msra.mxu0 0
      %313 = vmatprep.subr.bf16.mxu0 0
      %314 = vmatpush1.bf16.msra.mxu0 0
      %315 = vmatprep.subr.bf16.mxu0 0
      %316 = vmatpush1.bf16.msra.mxu0 0
      %317 = vmatprep.subr.bf16.mxu0 0
      %318 = vmatpush1.bf16.msra.mxu0 0
      %319 = vmatprep.subr.bf16.mxu0 0
      %320 = vmatpush1.bf16.msra.mxu0 0
      %321 = vmatprep.subr.bf16.mxu0 0
      %322 = vmatpush1.bf16.msra.mxu0 0
      %323 = vmatprep.subr.bf16.mxu0 0
      %324 = vmatpush1.bf16.msra.mxu0 0
      %325 = vmatprep.subr.bf16.mxu0 0
      %326 = vmatpush1.bf16.msra.mxu0 0
      %327 = vmatprep.subr.bf16.mxu0 0
      %328 = vmatpush1.bf16.msra.mxu0 0
      %329 = vmatprep.subr.bf16.mxu0 0
      %330 = vmatpush1.bf16.msra.mxu0 0
      %331 = vmatprep.subr.bf16.mxu0 0
      %332 = vmatpush1.bf16.msra.mxu0 0
      %333 = vmatprep.subr.bf16.mxu0 0
      %334 = vmatpush1.bf16.msra.mxu0 0
      %335 = vmatprep.mubr.bf16.mxu0 0
      %336 = vmatmul.mubr.bf16.gmra.mrb[0].mxu0 %v301
      %v337 = vpop.f32.mrb[0].mxu0
      %v338 = vadd.f32 0.0, %v337
      %v339 = vpop.f32.mrb[0].mxu0
      %v340 = vpop.f32.mrb[0].mxu0
      %v341 = vadd.f32 0.0, %v340
      %v342 = vpop.f32.mrb[0].mxu0
      %343 = vdwg.mxu0
      %v344 = vld [vmem:[%s3] sm:$0xf]
      %v345 = vld [vmem:[%s3 + $0x4] sm:$0xf]
      %v346 = vld [vmem:[%s3 + $0x8] sm:$0xf]
      %v347 = vld [vmem:[%s3 + $0xc] sm:$0xf]
      %v348 = vld [vmem:[%s3 + $0x10] sm:$0xf]
      %v349 = vld [vmem:[%s3 + $0x14] sm:$0xf]
      %v350 = vld [vmem:[%s3 + $0x18] sm:$0xf]
      %v351 = vld [vmem:[%s3 + $0x1c] sm:$0xf]
      %v360 = vunpack.c.l.b16 %v344
      %v361 = vunpack.c.l.b16 %v345
      %v362 = vunpack.c.l.b16 %v346
      %v363 = vunpack.c.l.b16 %v347
      %v364 = vunpack.c.l.b16 %v348
      %v365 = vunpack.c.l.b16 %v349
      %v366 = vunpack.c.l.b16 %v350
      %v367 = vunpack.c.l.b16 %v351
      %v368 = vpack.c.b16 %v361, %v360
      %v369 = vpack.c.b16 %v363, %v362
      %v370 = vpack.c.b16 %v365, %v364
      %v371 = vpack.c.b16 %v367, %v366
      %v375 = vunpack.c.l.b16 %v275
      %v376 = vunpack.c.l.b16 %v276
      %v377 = vunpack.c.l.b16 %v277
      %v378 = vpack.c.b16 %v376, %v375
      %v379 = vpack.c.b16 %v377, %v377
      %vm381 = vcmask 195584
      %v383 = vsel %vm381, %v368, 0
      %v386 = vsel %vm381, %v369, 0
      %v389 = vsel %vm381, %v370, 0
      %v392 = vsel %vm381, %v371, 0
      %vm394 = vcmask 1043456
      %v396 = vsel %vm394, %v379, 0
      %398 = vmatprep.subr.bf16.mxu0 0
      %399 = vmatpush1.bf16.msra.mxu0 %v378
      %400 = vmatprep.subr.bf16.mxu0 0
      %401 = vmatpush1.bf16.msra.mxu0 %v396
      %402 = vmatprep.subr.bf16.mxu0 0
      %403 = vmatpush1.bf16.msra.mxu0 0
      %404 = vmatprep.subr.bf16.mxu0 0
      %405 = vmatpush1.bf16.msra.mxu0 0
      %406 = vmatprep.subr.bf16.mxu0 0
      %407 = vmatpush1.bf16.msra.mxu0 0
      %408 = vmatprep.subr.bf16.mxu0 0
      %409 = vmatpush1.bf16.msra.mxu0 0
      %410 = vmatprep.subr.bf16.mxu0 0
      %411 = vmatpush1.bf16.msra.mxu0 0
      %412 = vmatprep.subr.bf16.mxu0 0
      %413 = vmatpush1.bf16.msra.mxu0 0
      %414 = vmatprep.subr.bf16.mxu0 0
      %415 = vmatpush1.bf16.msra.mxu0 0
      %416 = vmatprep.subr.bf16.mxu0 0
      %417 = vmatpush1.bf16.msra.mxu0 0
      %418 = vmatprep.subr.bf16.mxu0 0
      %419 = vmatpush1.bf16.msra.mxu0 0
      %420 = vmatprep.subr.bf16.mxu0 0
      %421 = vmatpush1.bf16.msra.mxu0 0
      %422 = vmatprep.subr.bf16.mxu0 0
      %423 = vmatpush1.bf16.msra.mxu0 0
      %424 = vmatprep.subr.bf16.mxu0 0
      %425 = vmatpush1.bf16.msra.mxu0 0
      %426 = vmatprep.subr.bf16.mxu0 0
      %427 = vmatpush1.bf16.msra.mxu0 0
      %428 = vmatprep.subr.bf16.mxu0 0
      %429 = vmatpush1.bf16.msra.mxu0 0
      %430 = vmatprep.mubr.bf16.mxu0 0
      %431 = vmatmul.mubr.bf16.gmra.mrb[0].mxu0 %v383
      %v432 = vpop.f32.mrb[0].mxu0
      %v433 = vadd.f32 0.0, %v432
      %v434 = vpop.f32.mrb[0].mxu0
      %v435 = vpop.f32.mrb[0].mxu0
      %v436 = vadd.f32 0.0, %v435
      %v437 = vpop.f32.mrb[0].mxu0
      %438 = vmatprep.mubr.bf16.mxu0 0
      %439 = vmatmul.mubr.bf16.gmra.mrb[0].mxu0 %v386
      %v440 = vpop.f32.mrb[0].mxu0
      %v441 = vadd.f32 0.0, %v440
      %v442 = vpop.f32.mrb[0].mxu0
      %v443 = vpop.f32.mrb[0].mxu0
      %v444 = vadd.f32 0.0, %v443
      %v445 = vpop.f32.mrb[0].mxu0
      %446 = vmatprep.mubr.bf16.mxu0 0
      %447 = vmatmul.mubr.bf16.gmra.mrb[0].mxu0 %v389
      %v448 = vpop.f32.mrb[0].mxu0
      %v449 = vadd.f32 0.0, %v448
      %v450 = vpop.f32.mrb[0].mxu0
      %v451 = vpop.f32.mrb[0].mxu0
      %v452 = vadd.f32 0.0, %v451
      %v453 = vpop.f32.mrb[0].mxu0
      %454 = vmatprep.mubr.bf16.mxu0 0
      %455 = vmatmul.mubr.bf16.gmra.mrb[0].mxu0 %v392
      %v456 = vpop.f32.mrb[0].mxu0
      %v457 = vadd.f32 0.0, %v456
      %v458 = vpop.f32.mrb[0].mxu0
      %v459 = vpop.f32.mrb[0].mxu0
      %v460 = vadd.f32 0.0, %v459
      %v461 = vpop.f32.mrb[0].mxu0
      %462 = vdwg.mxu0
      %465 = vrot.lane.b32.xlu0 %v338, 112
      %v466 = vpop.permute.xlu0 %465
      %467 = vrot.lane.b32.xlu0 %v341, 112
      %v468 = vpop.permute.xlu0 %467
      %471 = vrot.lane.b32.xlu0 %v338, 96
      %v472 = vpop.permute.xlu0 %471
      %473 = vrot.lane.b32.xlu0 %v341, 96
      %v474 = vpop.permute.xlu0 %473
      %477 = vrot.lane.b32.xlu0 %v338, 80
      %v478 = vpop.permute.xlu0 %477
      %479 = vrot.lane.b32.xlu0 %v341, 80
      %v480 = vpop.permute.xlu0 %479
      %v483 = vmul.f32 %v338, %v338
      %v484 = vmul.f32 %v341, %v341
      %v485 = vmul.f32 %v466, %v466
      %v486 = vmul.f32 %v468, %v468
      %v487 = vmul.f32 %v472, %v472
      %v488 = vmul.f32 %v474, %v474
      %v489 = vmul.f32 %v478, %v478
      %v490 = vmul.f32 %v480, %v480
      %vm491 = vcmask 130048
      %v492 = vsel %vm491, %v483, 0.0
      %493 = vadd.xlane.f32.xlu0 %v492
      %v494 = vpop.xlane.xlu0 %493
      %v495 = vsel %vm491, %v484, 0.0
      %496 = vadd.xlane.f32.xlu0 %v495
      %v497 = vpop.xlane.xlu0 %496
      %v498 = vsel %vm491, %v485, 0.0
      %499 = vadd.xlane.f32.xlu0 %v498
      %v500 = vpop.xlane.xlu0 %499
      %v501 = vsel %vm491, %v486, 0.0
      %502 = vadd.xlane.f32.xlu0 %v501
      %v503 = vpop.xlane.xlu0 %502
      %v504 = vsel %vm491, %v487, 0.0
      %505 = vadd.xlane.f32.xlu0 %v504
      %v506 = vpop.xlane.xlu0 %505
      %v507 = vsel %vm491, %v488, 0.0
      %508 = vadd.xlane.f32.xlu0 %v507
      %v509 = vpop.xlane.xlu0 %508
      %v510 = vsel %vm491, %v489, 0.0
      %511 = vadd.xlane.f32.xlu0 %v510
      %v512 = vpop.xlane.xlu0 %511
      %v513 = vsel %vm491, %v490, 0.0
      %514 = vadd.xlane.f32.xlu0 %v513
      %v515 = vpop.xlane.xlu0 %514
      %v516 = vrcp.pop 16.0
      %v517 = vmul.f32 %v494, %v516
      %v518 = vmul.f32 %v497, %v516
      %v519 = vmul.f32 %v500, %v516
      %v520 = vmul.f32 %v503, %v516
      %v521 = vmul.f32 %v506, %v516
      %v522 = vmul.f32 %v509, %v516
      %v523 = vmul.f32 %v512, %v516
      %v524 = vmul.f32 %v515, %v516
      %v525 = vadd.f32 %v517, 1e-06
      %v526 = vadd.f32 %v518, 1e-06
      %v527 = vadd.f32 %v519, 1e-06
      %v528 = vadd.f32 %v520, 1e-06
      %v529 = vadd.f32 %v521, 1e-06
      %v530 = vadd.f32 %v522, 1e-06
      %v531 = vadd.f32 %v523, 1e-06
      %v532 = vadd.f32 %v524, 1e-06
      %v533 = vrsqrt.pop %v525
      %v534 = vrsqrt.pop %v526
      %v535 = vrsqrt.pop %v527
      %v536 = vrsqrt.pop %v528
      %v537 = vrsqrt.pop %v529
      %v538 = vrsqrt.pop %v530
      %v539 = vrsqrt.pop %v531
      %v540 = vrsqrt.pop %v532
      %v541 = vmul.f32 %v338, %v533
      %v542 = vmul.f32 %v341, %v534
      %v543 = vmul.f32 %v466, %v535
      %v544 = vmul.f32 %v468, %v536
      %v545 = vmul.f32 %v472, %v537
      %v546 = vmul.f32 %v474, %v538
      %v547 = vmul.f32 %v478, %v539
      %v548 = vmul.f32 %v480, %v540
      %v549 = vld [vmem:[%s5] sm:$0x1]
      %v551 = vlaneseq
      %v552 = vshrl.u32 %v551, 7
      %v553 = vsub.s32 0, %v552
      %v554 = vrot.slane %v549, %v553
      %v556 = vmul.f32 %v541, %v554
      %v557 = vmul.f32 %v542, %v554
      %v558 = vmul.f32 %v543, %v554
      %v559 = vmul.f32 %v544, %v554
      %v560 = vmul.f32 %v545, %v554
      %v561 = vmul.f32 %v546, %v554
      %v562 = vmul.f32 %v547, %v554
      %v563 = vmul.f32 %v548, %v554
      %v564 = vmul.f32 %v433, %v433
      %v565 = vmul.f32 %v436, %v436
      %v566 = vmul.f32 %v441, %v441
      %v567 = vmul.f32 %v444, %v444
      %vm568 = vcmask 64512
      %v569 = vsel %vm568, %v564, 0.0
      %v570 = vsel %vm568, %v565, 0.0
      %v571 = vadd.f32 %v569, %v570
      %v572 = vrot.slane %v571, 4
      %v573 = vadd.f32 %v571, %v572
      %v574 = vrot.slane %v573, 2
      %v575 = vadd.f32 %v573, %v574
      %v576 = vrot.slane %v575, 1
      %v577 = vadd.f32 %v575, %v576
      %v578 = vsel %vm568, %v566, 0.0
      %v579 = vsel %vm568, %v567, 0.0
      %v580 = vadd.f32 %v578, %v579
      %v581 = vrot.slane %v580, 4
      %v582 = vadd.f32 %v580, %v581
      %v583 = vrot.slane %v582, 2
      %v584 = vadd.f32 %v582, %v583
      %v585 = vrot.slane %v584, 1
      %v586 = vadd.f32 %v584, %v585
      %v587 = vmul.f32 %v577, %v516
      %v588 = vmul.f32 %v586, %v516
      %v589 = vadd.f32 %v587, 1e-06
      %v590 = vadd.f32 %v588, 1e-06
      %v591 = vrsqrt.pop %v589
      %v592 = vrsqrt.pop %v590
      %v593 = vmul.f32 %v433, %v591
      %v594 = vmul.f32 %v436, %v591
      %v595 = vmul.f32 %v441, %v592
      %v596 = vmul.f32 %v444, %v592
      %v597 = vpack.c.bf16 %v557, %v556
      %v598 = vpack.c.bf16 %v559, %v558
      %v599 = vpack.c.bf16 %v561, %v560
      %v600 = vpack.c.bf16 %v563, %v562
      %v601 = vpack.c.bf16 %v594, %v593
      %v602 = vpack.c.bf16 %v596, %v595
      %v604 = vsel %vm491, %v597, 0
      %606 = vmatprep.subr.bf16.mxu0 0
      %607 = vmatpush1.bf16.msra.mxu0 %v601
      %608 = vmatprep.subr.bf16.mxu0 0
      %609 = vmatpush1.bf16.msra.mxu0 0
      %610 = vmatprep.subr.bf16.mxu0 0
      %611 = vmatpush1.bf16.msra.mxu0 0
      %612 = vmatprep.subr.bf16.mxu0 0
      %613 = vmatpush1.bf16.msra.mxu0 0
      %614 = vmatprep.subr.bf16.mxu0 0
      %615 = vmatpush1.bf16.msra.mxu0 0
      %616 = vmatprep.subr.bf16.mxu0 0
      %617 = vmatpush1.bf16.msra.mxu0 0
      %618 = vmatprep.subr.bf16.mxu0 0
      %619 = vmatpush1.bf16.msra.mxu0 0
      %620 = vmatprep.subr.bf16.mxu0 0
      %621 = vmatpush1.bf16.msra.mxu0 0
      %622 = vmatprep.subr.bf16.mxu0 0
      %623 = vmatpush1.bf16.msra.mxu0 0
      %624 = vmatprep.subr.bf16.mxu0 0
      %625 = vmatpush1.bf16.msra.mxu0 0
      %626 = vmatprep.subr.bf16.mxu0 0
      %627 = vmatpush1.bf16.msra.mxu0 0
      %628 = vmatprep.subr.bf16.mxu0 0
      %629 = vmatpush1.bf16.msra.mxu0 0
      %630 = vmatprep.subr.bf16.mxu0 0
      %631 = vmatpush1.bf16.msra.mxu0 0
      %632 = vmatprep.subr.bf16.mxu0 0
      %633 = vmatpush1.bf16.msra.mxu0 0
      %634 = vmatprep.subr.bf16.mxu0 0
      %635 = vmatpush1.bf16.msra.mxu0 0
      %636 = vmatprep.subr.bf16.mxu0 0
      %637 = vmatpush1.bf16.msra.mxu0 0
      %638 = vmatprep.mubr.bf16.mxu0 0
      %639 = vmatmul.mubr.bf16.gmra.mrb[0].mxu0 %v604
      %v640 = vpop.f32.mrb[0].mxu0
      %v641 = vadd.f32 0.0, %v640
      %v642 = vpop.f32.mrb[0].mxu0
      %v643 = vpop.f32.mrb[0].mxu0
      %v644 = vadd.f32 0.0, %v643
      %v645 = vpop.f32.mrb[0].mxu0
      %646 = vdwg.mxu0
      %v648 = vsel %vm491, %v598, 0
      %650 = vmatprep.subr.bf16.mxu0 0
      %651 = vmatpush1.bf16.msra.mxu0 %v601
      %652 = vmatprep.subr.bf16.mxu0 0
      %653 = vmatpush1.bf16.msra.mxu0 0
      %654 = vmatprep.subr.bf16.mxu0 0
      %655 = vmatpush1.bf16.msra.mxu0 0
      %656 = vmatprep.subr.bf16.mxu0 0
      %657 = vmatpush1.bf16.msra.mxu0 0
      %658 = vmatprep.subr.bf16.mxu0 0
      %659 = vmatpush1.bf16.msra.mxu0 0
      %660 = vmatprep.subr.bf16.mxu0 0
      %661 = vmatpush1.bf16.msra.mxu0 0
      %662 = vmatprep.subr.bf16.mxu0 0
      %663 = vmatpush1.bf16.msra.mxu0 0
      %664 = vmatprep.subr.bf16.mxu0 0
      %665 = vmatpush1.bf16.msra.mxu0 0
      %666 = vmatprep.subr.bf16.mxu0 0
      %667 = vmatpush1.bf16.msra.mxu0 0
      %668 = vmatprep.subr.bf16.mxu0 0
      %669 = vmatpush1.bf16.msra.mxu0 0
      %670 = vmatprep.subr.bf16.mxu0 0
      %671 = vmatpush1.bf16.msra.mxu0 0
      %672 = vmatprep.subr.bf16.mxu0 0
      %673 = vmatpush1.bf16.msra.mxu0 0
      %674 = vmatprep.subr.bf16.mxu0 0
      %675 = vmatpush1.bf16.msra.mxu0 0
      %676 = vmatprep.subr.bf16.mxu0 0
      %677 = vmatpush1.bf16.msra.mxu0 0
      %678 = vmatprep.subr.bf16.mxu0 0
      %679 = vmatpush1.bf16.msra.mxu0 0
      %680 = vmatprep.subr.bf16.mxu0 0
      %681 = vmatpush1.bf16.msra.mxu0 0
      %682 = vmatprep.mubr.bf16.mxu0 0
      %683 = vmatmul.mubr.bf16.gmra.mrb[0].mxu0 %v648
      %v684 = vpop.f32.mrb[0].mxu0
      %v685 = vadd.f32 0.0, %v684
      %v686 = vpop.f32.mrb[0].mxu0
      %v687 = vpop.f32.mrb[0].mxu0
      %v688 = vadd.f32 0.0, %v687
      %v689 = vpop.f32.mrb[0].mxu0
      %690 = vdwg.mxu0
      %v692 = vsel %vm491, %v599, 0
      %694 = vmatprep.subr.bf16.mxu0 0
      %695 = vmatpush1.bf16.msra.mxu0 %v602
      %696 = vmatprep.subr.bf16.mxu0 0
      %697 = vmatpush1.bf16.msra.mxu0 0
      %698 = vmatprep.subr.bf16.mxu0 0
      %699 = vmatpush1.bf16.msra.mxu0 0
      %700 = vmatprep.subr.bf16.mxu0 0
      %701 = vmatpush1.bf16.msra.mxu0 0
      %702 = vmatprep.subr.bf16.mxu0 0
      %703 = vmatpush1.bf16.msra.mxu0 0
      %704 = vmatprep.subr.bf16.mxu0 0
      %705 = vmatpush1.bf16.msra.mxu0 0
      %706 = vmatprep.subr.bf16.mxu0 0
      %707 = vmatpush1.bf16.msra.mxu0 0
      %708 = vmatprep.subr.bf16.mxu0 0
      %709 = vmatpush1.bf16.msra.mxu0 0
      %710 = vmatprep.subr.bf16.mxu0 0
      %711 = vmatpush1.bf16.msra.mxu0 0
      %712 = vmatprep.subr.bf16.mxu0 0
      %713 = vmatpush1.bf16.msra.mxu0 0
      %714 = vmatprep.subr.bf16.mxu0 0
      %715 = vmatpush1.bf16.msra.mxu0 0
      %716 = vmatprep.subr.bf16.mxu0 0
      %717 = vmatpush1.bf16.msra.mxu0 0
      %718 = vmatprep.subr.bf16.mxu0 0
      %719 = vmatpush1.bf16.msra.mxu0 0
      %720 = vmatprep.subr.bf16.mxu0 0
      %721 = vmatpush1.bf16.msra.mxu0 0
      %722 = vmatprep.subr.bf16.mxu0 0
      %723 = vmatpush1.bf16.msra.mxu0 0
      %724 = vmatprep.subr.bf16.mxu0 0
      %725 = vmatpush1.bf16.msra.mxu0 0
      %726 = vmatprep.mubr.bf16.mxu0 0
      %727 = vmatmul.mubr.bf16.gmra.mrb[0].mxu0 %v692
      %v728 = vpop.f32.mrb[0].mxu0
      %v729 = vadd.f32 0.0, %v728
      %v730 = vpop.f32.mrb[0].mxu0
      %v731 = vpop.f32.mrb[0].mxu0
      %v732 = vadd.f32 0.0, %v731
      %v733 = vpop.f32.mrb[0].mxu0
      %734 = vdwg.mxu0
      %v736 = vsel %vm491, %v600, 0
      %738 = vmatprep.subr.bf16.mxu0 0
      %739 = vmatpush1.bf16.msra.mxu0 %v602
      %740 = vmatprep.subr.bf16.mxu0 0
      %741 = vmatpush1.bf16.msra.mxu0 0
      %742 = vmatprep.subr.bf16.mxu0 0
      %743 = vmatpush1.bf16.msra.mxu0 0
      %744 = vmatprep.subr.bf16.mxu0 0
      %745 = vmatpush1.bf16.msra.mxu0 0
      %746 = vmatprep.subr.bf16.mxu0 0
      %747 = vmatpush1.bf16.msra.mxu0 0
      %748 = vmatprep.subr.bf16.mxu0 0
      %749 = vmatpush1.bf16.msra.mxu0 0
      %750 = vmatprep.subr.bf16.mxu0 0
      %751 = vmatpush1.bf16.msra.mxu0 0
      %752 = vmatprep.subr.bf16.mxu0 0
      %753 = vmatpush1.bf16.msra.mxu0 0
      %754 = vmatprep.subr.bf16.mxu0 0
      %755 = vmatpush1.bf16.msra.mxu0 0
      %756 = vmatprep.subr.bf16.mxu0 0
      %757 = vmatpush1.bf16.msra.mxu0 0
      %758 = vmatprep.subr.bf16.mxu0 0
      %759 = vmatpush1.bf16.msra.mxu0 0
      %760 = vmatprep.subr.bf16.mxu0 0
      %761 = vmatpush1.bf16.msra.mxu0 0
      %762 = vmatprep.subr.bf16.mxu0 0
      %763 = vmatpush1.bf16.msra.mxu0 0
      %764 = vmatprep.subr.bf16.mxu0 0
      %765 = vmatpush1.bf16.msra.mxu0 0
      %766 = vmatprep.subr.bf16.mxu0 0
      %767 = vmatpush1.bf16.msra.mxu0 0
      %768 = vmatprep.subr.bf16.mxu0 0
      %769 = vmatpush1.bf16.msra.mxu0 0
      %770 = vmatprep.mubr.bf16.mxu0 0
      %771 = vmatmul.mubr.bf16.gmra.mrb[0].mxu0 %v736
      %v772 = vpop.f32.mrb[0].mxu0
      %v773 = vadd.f32 0.0, %v772
      %v774 = vpop.f32.mrb[0].mxu0
      %v775 = vpop.f32.mrb[0].mxu0
      %v776 = vadd.f32 0.0, %v775
      %v777 = vpop.f32.mrb[0].mxu0
      %778 = vdwg.mxu0
      %v779 = vmul.f32 %v641, 1.442695
      %v780 = vpow.pop %v779
      %v781 = vmul.f32 %v644, 1.442695
      %v782 = vpow.pop %v781
      %v783 = vmul.f32 %v685, 1.442695
      %v784 = vpow.pop %v783
      %v785 = vmul.f32 %v688, 1.442695
      %v786 = vpow.pop %v785
      %v787 = vmul.f32 %v729, 1.442695
      %v788 = vpow.pop %v787
      %v789 = vmul.f32 %v732, 1.442695
      %v790 = vpow.pop %v789
      %v791 = vmul.f32 %v773, 1.442695
      %v792 = vpow.pop %v791
      %v793 = vmul.f32 %v776, 1.442695
      %v794 = vpow.pop %v793
      %v795 = vsel %vm568, %v780, 0.0
      %796 = vadd.xlane.f32.xlu0 %v795
      %v797 = vpop.xlane.xlu0 %796
      %v798 = vsel %vm568, %v782, 0.0
      %799 = vadd.xlane.f32.xlu0 %v798
      %v800 = vpop.xlane.xlu0 %799
      %v801 = vsel %vm568, %v784, 0.0
      %802 = vadd.xlane.f32.xlu0 %v801
      %v803 = vpop.xlane.xlu0 %802
      %v804 = vsel %vm568, %v786, 0.0
      %805 = vadd.xlane.f32.xlu0 %v804
      %v806 = vpop.xlane.xlu0 %805
      %v807 = vsel %vm568, %v788, 0.0
      %808 = vadd.xlane.f32.xlu0 %v807
      %v809 = vpop.xlane.xlu0 %808
      %v810 = vsel %vm568, %v790, 0.0
      %811 = vadd.xlane.f32.xlu0 %v810
      %v812 = vpop.xlane.xlu0 %811
      %v813 = vsel %vm568, %v792, 0.0
      %814 = vadd.xlane.f32.xlu0 %v813
      %v815 = vpop.xlane.xlu0 %814
      %v816 = vsel %vm568, %v794, 0.0
      %817 = vadd.xlane.f32.xlu0 %v816
      %v818 = vpop.xlane.xlu0 %817
      %v819 = vrcp.pop %v797
      %v820 = vrcp.pop %v800
      %v821 = vrcp.pop %v803
      %v822 = vrcp.pop %v806
      %v823 = vrcp.pop %v809
      %v824 = vrcp.pop %v812
      %v825 = vrcp.pop %v815
      %v826 = vrcp.pop %v818
      %v827 = vmul.f32 %v780, %v819
      %v828 = vmul.f32 %v782, %v820
      %v829 = vmul.f32 %v784, %v821
      %v830 = vmul.f32 %v786, %v822
      %v831 = vmul.f32 %v788, %v823
      %v832 = vmul.f32 %v790, %v824
      %v833 = vmul.f32 %v792, %v825
      %v834 = vmul.f32 %v794, %v826
      %v835 = vpack.c.bf16 %v452, %v449
      %v836 = vpack.c.bf16 %v460, %v457
      %v837 = vpack.c.bf16 %v828, %v827
      %v838 = vpack.c.bf16 %v830, %v829
      %v839 = vpack.c.bf16 %v832, %v831
      %v840 = vpack.c.bf16 %v834, %v833
      %v842 = vsel %vm568, %v835, 0
      %v845 = vsel %vm568, %v837, 0
      %847 = vmatprep.subr.bf16.mxu0 0
      %848 = vmatpush1.bf16.xpose.msra.mxu0 %v845
      %849 = vmatprep.subr.bf16.mxu0 0
      %850 = vmatpush1.bf16.xpose.msra.mxu0 0
      %851 = vmatprep.subr.bf16.mxu0 0
      %852 = vmatpush1.bf16.xpose.msra.mxu0 0
      %853 = vmatprep.subr.bf16.mxu0 0
      %854 = vmatpush1.bf16.xpose.msra.mxu0 0
      %855 = vmatprep.subr.bf16.mxu0 0
      %856 = vmatpush1.bf16.xpose.msra.mxu0 0
      %857 = vmatprep.subr.bf16.mxu0 0
      %858 = vmatpush1.bf16.xpose.msra.mxu0 0
      %859 = vmatprep.subr.bf16.mxu0 0
      %860 = vmatpush1.bf16.xpose.msra.mxu0 0
      %861 = vmatprep.subr.bf16.mxu0 0
      %862 = vmatpush1.bf16.xpose.msra.mxu0 0
      %863 = vmatprep.subr.bf16.mxu0 0
      %864 = vmatpush1.bf16.xpose.msra.mxu0 0
      %865 = vmatprep.subr.bf16.mxu0 0
      %866 = vmatpush1.bf16.xpose.msra.mxu0 0
      %867 = vmatprep.subr.bf16.mxu0 0
      %868 = vmatpush1.bf16.xpose.msra.mxu0 0
      %869 = vmatprep.subr.bf16.mxu0 0
      %870 = vmatpush1.bf16.xpose.msra.mxu0 0
      %871 = vmatprep.subr.bf16.mxu0 0
      %872 = vmatpush1.bf16.xpose.msra.mxu0 0
      %873 = vmatprep.subr.bf16.mxu0 0
      %874 = vmatpush1.bf16.xpose.msra.mxu0 0
      %875 = vmatprep.subr.bf16.mxu0 0
      %876 = vmatpush1.bf16.xpose.msra.mxu0 0
      %877 = vmatprep.subr.bf16.mxu0 0
      %878 = vmatpush1.bf16.xpose.msra.mxu0 0
      %879 = vmatprep.mubr.bf16.mxu0 0
      %880 = vmatmul.mubr.bf16.gmra.mrb[0].mxu0 %v842
      %v881 = vpop.f32.mrb[0].mxu0
      %v882 = vadd.f32 0.0, %v881
      %v883 = vpop.f32.mrb[0].mxu0
      %v884 = vpop.f32.mrb[0].mxu0
      %v885 = vadd.f32 0.0, %v884
      %v886 = vpop.f32.mrb[0].mxu0
      %887 = vdwg.mxu0
      %v889 = vsel %vm568, %v838, 0
      %891 = vmatprep.subr.bf16.mxu0 0
      %892 = vmatpush1.bf16.xpose.msra.mxu0 %v889
      %893 = vmatprep.subr.bf16.mxu0 0
      %894 = vmatpush1.bf16.xpose.msra.mxu0 0
      %895 = vmatprep.subr.bf16.mxu0 0
      %896 = vmatpush1.bf16.xpose.msra.mxu0 0
      %897 = vmatprep.subr.bf16.mxu0 0
      %898 = vmatpush1.bf16.xpose.msra.mxu0 0
      %899 = vmatprep.subr.bf16.mxu0 0
      %900 = vmatpush1.bf16.xpose.msra.mxu0 0
      %901 = vmatprep.subr.bf16.mxu0 0
      %902 = vmatpush1.bf16.xpose.msra.mxu0 0
      %903 = vmatprep.subr.bf16.mxu0 0
      %904 = vmatpush1.bf16.xpose.msra.mxu0 0
      %905 = vmatprep.subr.bf16.mxu0 0
      %906 = vmatpush1.bf16.xpose.msra.mxu0 0
      %907 = vmatprep.subr.bf16.mxu0 0
      %908 = vmatpush1.bf16.xpose.msra.mxu0 0
      %909 = vmatprep.subr.bf16.mxu0 0
      %910 = vmatpush1.bf16.xpose.msra.mxu0 0
      %911 = vmatprep.subr.bf16.mxu0 0
      %912 = vmatpush1.bf16.xpose.msra.mxu0 0
      %913 = vmatprep.subr.bf16.mxu0 0
      %914 = vmatpush1.bf16.xpose.msra.mxu0 0
      %915 = vmatprep.subr.bf16.mxu0 0
      %916 = vmatpush1.bf16.xpose.msra.mxu0 0
      %917 = vmatprep.subr.bf16.mxu0 0
      %918 = vmatpush1.bf16.xpose.msra.mxu0 0
      %919 = vmatprep.subr.bf16.mxu0 0
      %920 = vmatpush1.bf16.xpose.msra.mxu0 0
      %921 = vmatprep.subr.bf16.mxu0 0
      %922 = vmatpush1.bf16.xpose.msra.mxu0 0
      %923 = vmatprep.mubr.bf16.mxu0 0
      %924 = vmatmul.mubr.bf16.gmra.mrb[0].mxu0 %v842
      %v925 = vpop.f32.mrb[0].mxu0
      %v926 = vadd.f32 0.0, %v925
      %v927 = vpop.f32.mrb[0].mxu0
      %v928 = vpop.f32.mrb[0].mxu0
      %v929 = vadd.f32 0.0, %v928
      %v930 = vpop.f32.mrb[0].mxu0
      %931 = vdwg.mxu0
      %v933 = vsel %vm568, %v836, 0
      %v936 = vsel %vm568, %v839, 0
      %938 = vmatprep.subr.bf16.mxu0 0
      %939 = vmatpush1.bf16.xpose.msra.mxu0 %v936
      %940 = vmatprep.subr.bf16.mxu0 0
      %941 = vmatpush1.bf16.xpose.msra.mxu0 0
      %942 = vmatprep.subr.bf16.mxu0 0
      %943 = vmatpush1.bf16.xpose.msra.mxu0 0
      %944 = vmatprep.subr.bf16.mxu0 0
      %945 = vmatpush1.bf16.xpose.msra.mxu0 0
      %946 = vmatprep.subr.bf16.mxu0 0
      %947 = vmatpush1.bf16.xpose.msra.mxu0 0
      %948 = vmatprep.subr.bf16.mxu0 0
      %949 = vmatpush1.bf16.xpose.msra.mxu0 0
      %950 = vmatprep.subr.bf16.mxu0 0
      %951 = vmatpush1.bf16.xpose.msra.mxu0 0
      %952 = vmatprep.subr.bf16.mxu0 0
      %953 = vmatpush1.bf16.xpose.msra.mxu0 0
      %954 = vmatprep.subr.bf16.mxu0 0
      %955 = vmatpush1.bf16.xpose.msra.mxu0 0
      %956 = vmatprep.subr.bf16.mxu0 0
      %957 = vmatpush1.bf16.xpose.msra.mxu0 0
      %958 = vmatprep.subr.bf16.mxu0 0
      %959 = vmatpush1.bf16.xpose.msra.mxu0 0
      %960 = vmatprep.subr.bf16.mxu0 0
      %961 = vmatpush1.bf16.xpose.msra.mxu0 0
      %962 = vmatprep.subr.bf16.mxu0 0
      %963 = vmatpush1.bf16.xpose.msra.mxu0 0
      %964 = vmatprep.subr.bf16.mxu0 0
      %965 = vmatpush1.bf16.xpose.msra.mxu0 0
      %966 = vmatprep.subr.bf16.mxu0 0
      %967 = vmatpush1.bf16.xpose.msra.mxu0 0
      %968 = vmatprep.subr.bf16.mxu0 0
      %969 = vmatpush1.bf16.xpose.msra.mxu0 0
      %970 = vmatprep.mubr.bf16.mxu0 0
      %971 = vmatmul.mubr.bf16.gmra.mrb[0].mxu0 %v933
      %v972 = vpop.f32.mrb[0].mxu0
      %v973 = vadd.f32 0.0, %v972
      %v974 = vpop.f32.mrb[0].mxu0
      %v975 = vpop.f32.mrb[0].mxu0
      %v976 = vadd.f32 0.0, %v975
      %v977 = vpop.f32.mrb[0].mxu0
      %978 = vdwg.mxu0
      %v980 = vsel %vm568, %v840, 0
      %982 = vmatprep.subr.bf16.mxu0 0
      %983 = vmatpush1.bf16.xpose.msra.mxu0 %v980
      %984 = vmatprep.subr.bf16.mxu0 0
      %985 = vmatpush1.bf16.xpose.msra.mxu0 0
      %986 = vmatprep.subr.bf16.mxu0 0
      %987 = vmatpush1.bf16.xpose.msra.mxu0 0
      %988 = vmatprep.subr.bf16.mxu0 0
      %989 = vmatpush1.bf16.xpose.msra.mxu0 0
      %990 = vmatprep.subr.bf16.mxu0 0
      %991 = vmatpush1.bf16.xpose.msra.mxu0 0
      %992 = vmatprep.subr.bf16.mxu0 0
      %993 = vmatpush1.bf16.xpose.msra.mxu0 0
      %994 = vmatprep.subr.bf16.mxu0 0
      %995 = vmatpush1.bf16.xpose.msra.mxu0 0
      %996 = vmatprep.subr.bf16.mxu0 0
      %997 = vmatpush1.bf16.xpose.msra.mxu0 0
      %998 = vmatprep.subr.bf16.mxu0 0
      %999 = vmatpush1.bf16.xpose.msra.mxu0 0
      %1000 = vmatprep.subr.bf16.mxu0 0
      %1001 = vmatpush1.bf16.xpose.msra.mxu0 0
      %1002 = vmatprep.subr.bf16.mxu0 0
      %1003 = vmatpush1.bf16.xpose.msra.mxu0 0
      %1004 = vmatprep.subr.bf16.mxu0 0
      %1005 = vmatpush1.bf16.xpose.msra.mxu0 0
      %1006 = vmatprep.subr.bf16.mxu0 0
      %1007 = vmatpush1.bf16.xpose.msra.mxu0 0
      %1008 = vmatprep.subr.bf16.mxu0 0
      %1009 = vmatpush1.bf16.xpose.msra.mxu0 0
      %1010 = vmatprep.subr.bf16.mxu0 0
      %1011 = vmatpush1.bf16.xpose.msra.mxu0 0
      %1012 = vmatprep.subr.bf16.mxu0 0
      %1013 = vmatpush1.bf16.xpose.msra.mxu0 0
      %1014 = vmatprep.mubr.bf16.mxu0 0
      %1015 = vmatmul.mubr.bf16.gmra.mrb[0].mxu0 %v933
      %v1016 = vpop.f32.mrb[0].mxu0
      %v1017 = vadd.f32 0.0, %v1016
      %v1018 = vpop.f32.mrb[0].mxu0
      %v1019 = vpop.f32.mrb[0].mxu0
      %v1020 = vadd.f32 0.0, %v1019
      %v1021 = vpop.f32.mrb[0].mxu0
      %1022 = vdwg.mxu0
      %v1023 = vld [vmem:[%s4] sm:$0xf]
      %v1024 = vld [vmem:[%s4 + $0x4] sm:$0xf]
      %v1025 = vld [vmem:[%s4 + $0x8] sm:$0xf]
      %v1026 = vld [vmem:[%s4 + $0xc] sm:$0xf]
      %v1027 = vpack.c.bf16 %v885, %v882
      %v1028 = vpack.c.bf16 %v929, %v926
      %v1029 = vpack.c.bf16 %v976, %v973
      %v1030 = vpack.c.bf16 %v1020, %v1017
      %v1035 = vunpack.c.l.b16 %v1023
      %v1036 = vunpack.c.l.b16 %v1024
      %v1037 = vunpack.c.l.b16 %v1025
      %v1038 = vunpack.c.l.b16 %v1026
      %v1039 = vpack.c.b16 %v1036, %v1035
      %v1040 = vpack.c.b16 %v1038, %v1037
      %vm1041 = vcmask 523264
      %v1043 = vsel %vm1041, %v1039, 0
      %v1046 = vsel %vm1041, %v1040, 0
      %1048 = vmatprep.subr.bf16.mxu0 0
      %1049 = vmatpush1.bf16.msra.mxu0 %v1027
      %1050 = vmatprep.subr.bf16.mxu0 0
      %1051 = vmatpush1.bf16.msra.mxu0 %v1028
      %1052 = vmatprep.subr.bf16.mxu0 0
      %1053 = vmatpush1.bf16.msra.mxu0 %v1029
      %1054 = vmatprep.subr.bf16.mxu0 0
      %1055 = vmatpush1.bf16.msra.mxu0 %v1030
      %1056 = vmatprep.subr.bf16.mxu0 0
      %1057 = vmatpush1.bf16.msra.mxu0 0
      %1058 = vmatprep.subr.bf16.mxu0 0
      %1059 = vmatpush1.bf16.msra.mxu0 0
      %1060 = vmatprep.subr.bf16.mxu0 0
      %1061 = vmatpush1.bf16.msra.mxu0 0
      %1062 = vmatprep.subr.bf16.mxu0 0
      %1063 = vmatpush1.bf16.msra.mxu0 0
      %1064 = vmatprep.subr.bf16.mxu0 0
      %1065 = vmatpush1.bf16.msra.mxu0 0
      %1066 = vmatprep.subr.bf16.mxu0 0
      %1067 = vmatpush1.bf16.msra.mxu0 0
      %1068 = vmatprep.subr.bf16.mxu0 0
      %1069 = vmatpush1.bf16.msra.mxu0 0
      %1070 = vmatprep.subr.bf16.mxu0 0
      %1071 = vmatpush1.bf16.msra.mxu0 0
      %1072 = vmatprep.subr.bf16.mxu0 0
      %1073 = vmatpush1.bf16.msra.mxu0 0
      %1074 = vmatprep.subr.bf16.mxu0 0
      %1075 = vmatpush1.bf16.msra.mxu0 0
      %1076 = vmatprep.subr.bf16.mxu0 0
      %1077 = vmatpush1.bf16.msra.mxu0 0
      %1078 = vmatprep.subr.bf16.mxu0 0
      %1079 = vmatpush1.bf16.msra.mxu0 0
      %1080 = vmatprep.mubr.bf16.mxu0 0
      %1081 = vmatmul.mubr.bf16.gmra.mrb[0].mxu0 %v1043
      %v1082 = vpop.f32.mrb[0].mxu0
      %v1083 = vadd.f32 0.0, %v1082
      %v1084 = vpop.f32.mrb[0].mxu0
      %v1085 = vpop.f32.mrb[0].mxu0
      %v1086 = vadd.f32 0.0, %v1085
      %v1087 = vpop.f32.mrb[0].mxu0
      %1088 = vmatprep.mubr.bf16.mxu0 0
      %1089 = vmatmul.mubr.bf16.gmra.mrb[0].mxu0 %v1046
      %v1090 = vpop.f32.mrb[0].mxu0
      %v1091 = vadd.f32 0.0, %v1090
      %v1092 = vpop.f32.mrb[0].mxu0
      %v1093 = vpop.f32.mrb[0].mxu0
      %v1094 = vadd.f32 0.0, %v1093
      %v1095 = vpop.f32.mrb[0].mxu0
      %1096 = vdwg.mxu0
      %1097 = vst.msk [vmem:[%s271] sm:$0xff] %vm491, %v1083
      %1098 = vst.msk [vmem:[%s271 + $0x8] sm:$0xff] %vm491, %v1086
      %1099 = vst.msk [vmem:[%s271 + $0x10] sm:$0xff] %vm491, %v1091
      %1100 = vst.msk [vmem:[%s271 + $0x18] sm:$0xff] %vm491, %v1094
      %p1101 = scmp.lt.s32.totalorder %s17, 1
      %s1102 = scalar_select %p1101, %s17, 1
      %s1103 = smul.addr %s1102, 4
      %s1104 = smul.addr %s1103, 8
      %s1105 = scalar_lea.vmem %s6, %s1104
      // Predicated region
      $region45: #{tpu_custom_call.1} parent=43 // pred_check
        %p1106 = pneg %p171
      $region46: #{tpu_custom_call.1} parent=43 // pred_check_branch
        %1108 = sbr.rel (%p1106) target = $region48
      $region47: #{tpu_custom_call.1} parent=43 // pred_region
        _
      $region48: #{tpu_custom_call.1} parent=43 // pred_fallthru
        _
    $region44: #{tpu_custom_call.1} parent=5 // pred_fallthru
      _
    %p1109 = scmp.le.s32.totalorder 2, %s12
    // Predicated region
    $region49: #{tpu_custom_call.1} parent=5 // pred_check
      %p1110 = pneg %p1109
    $region50: #{tpu_custom_call.1} parent=5 // pred_check_branch
      %1112 = sbr.rel (%p1110) target = $region52
    $region51: #{tpu_custom_call.1} parent=5 // pred_region
      %s1113 = ssub.s32 %s12, 2
      // Predicated region
      $region53: #{tpu_custom_call.1} parent=51 // pred_check
        %p1114 = pneg %p177
      $region54: #{tpu_custom_call.1} parent=51 // pred_check_branch
        %1116 = sbr.rel (%p1114) target = $region56
      $region55: #{tpu_custom_call.1} parent=51 // pred_region
        %p1117 = scmp.lt.s32.totalorder %s18, 1
        %s1118 = scalar_select %p1117, %s18, 1
        %s1119 = smul.addr %s1118, 4
        %s1120 = smul.addr %s1119, 8
        %s1121 = scalar_lea.vmem %s6, %s1120
      $region56: #{tpu_custom_call.1} parent=51 // pred_fallthru
        _
    $region52: #{tpu_custom_call.1} parent=5 // pred_fallthru
      _
  $region6: #{tpu_custom_call.1} parent=0 // loop_footer
    %s16 = sadd.s32 1, %s12
  $region7: #{tpu_custom_call.1} parent=0 // loop_footer_branch
    %11 = sbr.rel target = $region3
  $region8: #{tpu_custom_call.1} parent=0 // loop_exit
    _

</llo_original>
